<compile_context>
chip_gen: v7x
topology: tpu7x:2x2x1
jax: 0.10.0
libtpu: 0.0.40
codegen_flags: <defaults>
</compile_context>

<pallas_src>
import jax
import jax.numpy as jnp
from jax.experimental import pallas as pl
from jax.experimental.pallas import tpu as pltpu


def decoder_kernel(x_ref, w1_ref, b1_ref, w2_ref, b2_ref, w3_ref, b3_ref, o_ref):
    x = x_ref[...]                                   # [tb, 4]

    # ---- Layer 1 (4 -> 64) on the VPU: K=4 is too shallow for the MXU. ----
    h1 = b1_ref[...]                                 # [1, 64], broadcasts over rows
    h1 = h1 + x[:, 0:1] * w1_ref[0:1, :]
    h1 = h1 + x[:, 1:2] * w1_ref[1:2, :]
    h1 = h1 + x[:, 2:3] * w1_ref[2:3, :]
    h1 = h1 + x[:, 3:4] * w1_ref[3:4, :]
    h1 = jnp.maximum(h1, 0.0)                        # [tb, 64]

    # ---- Layers 2 & 3 on the MXU, f32 accumulation. ----
    h2 = jnp.dot(h1, w2_ref[...], preferred_element_type=jnp.float32) + b2_ref[...]
    h2 = jnp.maximum(h2, 0.0)                        # [tb, 128]
    h3 = jnp.dot(h2, w3_ref[...], preferred_element_type=jnp.float32) + b3_ref[...]
    o_ref[...] = h3.astype(o_ref.dtype)              # [tb, 256]


def _round_up(n: int, m: int) -> int:
    return ((n + m - 1) // m) * m


def decoder_forward(x, params, *, tb=512, min_grid_steps=2):
    """x: [B, 4] float32 -> [B, 256] float32. Handles any B (pads + slices)."""
    w1, b1, w2, b2, w3, b3 = params
    B, D_in = x.shape
    D_out = w3.shape[1]

    # Effective batch tile: large (up to tb) but no bigger than the
    # sublane-rounded batch; and prefer >=2 grid steps so both v7x TensorCores
    # get work under dimension_semantics=("parallel",).
    tb_eff = min(tb, _round_up(B, 8))
    if B > 8 and _round_up(B, tb_eff) // tb_eff < min_grid_steps:
        tb_eff = max(8, _round_up(pl.cdiv(B, min_grid_steps), 8))
    B_pad = _round_up(B, tb_eff)

    if B_pad != B:
        x = jnp.pad(x, ((0, B_pad - B), (0, 0)))     # zero rows: harmless, sliced off

    grid = (B_pad // tb_eff,)

    # Weights/biases: full blocks, constant index_map (resident every step).
    full = lambda arr: pl.BlockSpec(arr.shape, lambda i: (0,) * arr.ndim)

    out = pl.pallas_call(
        decoder_kernel,
        out_shape=jax.ShapeDtypeStruct((B_pad, D_out), jnp.float32),
        grid_spec=pltpu.PrefetchScalarGridSpec(
            num_scalar_prefetch=0,
            grid=grid,
            in_specs=[
                pl.BlockSpec((tb_eff, D_in), lambda i: (i, 0)),
                full(w1), full(b1), full(w2), full(b2), full(w3), full(b3),
            ],
            out_specs=pl.BlockSpec((tb_eff, D_out), lambda i: (i, 0)),
        ),
        compiler_params=pltpu.CompilerParams(
            dimension_semantics=("parallel",)),
    )(x, w1, b1, w2, b2, w3, b3)

    return out[:B] if B_pad != B else out


def init_params(key):
    """Deterministic init matching PyTorch nn.Linear default (U[-1/sqrt(fan_in), +1/sqrt(fan_in)]).

    Weights stored [in, out] so the kernel computes x @ W + b (== PyTorch's
    x @ W.T + b with W of shape [out, in]); biases kept as [1, out] rows.
    """
    dims = [(4, 64), (64, 128), (128, 256)]
    params = []
    for (fan_in, fan_out) in dims:
        key, kw, kb = jax.random.split(key, 3)
        bound = 1.0 / jnp.sqrt(fan_in)
        w = jax.random.uniform(kw, (fan_in, fan_out), jnp.float32, -bound, bound)
        b = jax.random.uniform(kb, (1, fan_out), jnp.float32, -bound, bound)
        params += [w, b]
    return tuple(params)


def decoder_ref(x, params):
    """Pure-JAX reference for correctness check."""
    w1, b1, w2, b2, w3, b3 = params
    h = jnp.maximum(x @ w1 + b1, 0.0)
    h = jnp.maximum(h @ w2 + b2, 0.0)
    return h @ w3 + b3


if __name__ == "__main__":
    key = jax.random.PRNGKey(0)
    key, kx = jax.random.split(key)

    # Small batch, deliberately NOT a multiple of 8: exercises the pad/slice
    # path and still yields a 2-step parallel grid (tb_eff=16 -> tiles of 16).
    B = 20
    x = jax.random.normal(kx, (B, 4), jnp.float32)
    params = init_params(key)

    out = decoder_forward(x, params)
    out = jax.block_until_ready(out)

    ref = decoder_ref(x, params)
    assert out.shape == (B, 256), out.shape
    assert jnp.allclose(out, ref, atol=1e-4, rtol=1e-5), "mismatch vs reference"

    print("KERNEL_OK")
</pallas_src>

<mosaic_0001>
module attributes {stable_mosaic.version = 11 : i64} {
  func.func @decoder_kernel(%arg0: i32, %arg1: memref<16x4xf32, #tpu.memory_space<vmem>>, %arg2: memref<4x64xf32, #tpu.memory_space<vmem>>, %arg3: memref<1x64xf32, #tpu.memory_space<vmem>>, %arg4: memref<64x128xf32, #tpu.memory_space<vmem>>, %arg5: memref<1x128xf32, #tpu.memory_space<vmem>>, %arg6: memref<128x256xf32, #tpu.memory_space<vmem>>, %arg7: memref<1x256xf32, #tpu.memory_space<vmem>>, %arg8: memref<16x256xf32, #tpu.memory_space<vmem>>) attributes {dimension_semantics = [#tpu.dimension_semantics<parallel>], iteration_bounds = array<i64: 2>, scalar_prefetch = 0 : i64, scratch_operands = 0 : i64, tpu.core_type = #tpu.core_type<tc>, window_params = [{transform_indices = @transform_0, window_bounds = array<i64: 16, 4>}, {pipeline_mode = #tpu.pipeline_mode<synchronous>, transform_indices = @transform_1, window_bounds = array<i64: 4, 64>}, {pipeline_mode = #tpu.pipeline_mode<synchronous>, transform_indices = @transform_2, window_bounds = array<i64: 1, 64>}, {pipeline_mode = #tpu.pipeline_mode<synchronous>, transform_indices = @transform_3, window_bounds = array<i64: 64, 128>}, {pipeline_mode = #tpu.pipeline_mode<synchronous>, transform_indices = @transform_4, window_bounds = array<i64: 1, 128>}, {pipeline_mode = #tpu.pipeline_mode<synchronous>, transform_indices = @transform_5, window_bounds = array<i64: 128, 256>}, {pipeline_mode = #tpu.pipeline_mode<synchronous>, transform_indices = @transform_6, window_bounds = array<i64: 1, 256>}, {transform_indices = @transform_7, window_bounds = array<i64: 16, 256>}]} {
    %c0 = arith.constant 0 : index
    %c0_0 = arith.constant 0 : index
    %0 = vector.load %arg1[%c0, %c0_0] : memref<16x4xf32, #tpu.memory_space<vmem>>, vector<16x4xf32>
    %c0_1 = arith.constant 0 : index
    %c0_2 = arith.constant 0 : index
    %1 = vector.load %arg3[%c0_1, %c0_2] : memref<1x64xf32, #tpu.memory_space<vmem>>, vector<1x64xf32>
    %2 = vector.extract_strided_slice %0 {offsets = [0, 0], sizes = [16, 1], strides = [1, 1]} : vector<16x4xf32> to vector<16x1xf32>
    %c0_3 = arith.constant 0 : index
    %c0_4 = arith.constant 0 : index
    %3 = vector.load %arg2[%c0_3, %c0_4] : memref<4x64xf32, #tpu.memory_space<vmem>>, vector<1x64xf32>
    %4 = vector.broadcast %2 : vector<16x1xf32> to vector<16x64xf32>
    %5 = vector.broadcast %3 : vector<1x64xf32> to vector<16x64xf32>
    %6 = arith.mulf %4, %5 : vector<16x64xf32>
    %7 = vector.broadcast %1 : vector<1x64xf32> to vector<16x64xf32>
    %8 = arith.addf %7, %6 : vector<16x64xf32>
    %9 = vector.extract_strided_slice %0 {offsets = [0, 1], sizes = [16, 1], strides = [1, 1]} : vector<16x4xf32> to vector<16x1xf32>
    %c1 = arith.constant 1 : index
    %c0_5 = arith.constant 0 : index
    %10 = vector.load %arg2[%c1, %c0_5] : memref<4x64xf32, #tpu.memory_space<vmem>>, vector<1x64xf32>
    %11 = vector.broadcast %9 : vector<16x1xf32> to vector<16x64xf32>
    %12 = vector.broadcast %10 : vector<1x64xf32> to vector<16x64xf32>
    %13 = arith.mulf %11, %12 : vector<16x64xf32>
    %14 = arith.addf %8, %13 : vector<16x64xf32>
    %15 = vector.extract_strided_slice %0 {offsets = [0, 2], sizes = [16, 1], strides = [1, 1]} : vector<16x4xf32> to vector<16x1xf32>
    %c2 = arith.constant 2 : index
    %c0_6 = arith.constant 0 : index
    %16 = vector.load %arg2[%c2, %c0_6] : memref<4x64xf32, #tpu.memory_space<vmem>>, vector<1x64xf32>
    %17 = vector.broadcast %15 : vector<16x1xf32> to vector<16x64xf32>
    %18 = vector.broadcast %16 : vector<1x64xf32> to vector<16x64xf32>
    %19 = arith.mulf %17, %18 : vector<16x64xf32>
    %20 = arith.addf %14, %19 : vector<16x64xf32>
    %21 = vector.extract_strided_slice %0 {offsets = [0, 3], sizes = [16, 1], strides = [1, 1]} : vector<16x4xf32> to vector<16x1xf32>
    %c3 = arith.constant 3 : index
    %c0_7 = arith.constant 0 : index
    %22 = vector.load %arg2[%c3, %c0_7] : memref<4x64xf32, #tpu.memory_space<vmem>>, vector<1x64xf32>
    %23 = vector.broadcast %21 : vector<16x1xf32> to vector<16x64xf32>
    %24 = vector.broadcast %22 : vector<1x64xf32> to vector<16x64xf32>
    %25 = arith.mulf %23, %24 : vector<16x64xf32>
    %26 = arith.addf %20, %25 : vector<16x64xf32>
    %cst = arith.constant 0.000000e+00 : f32
    %27 = vector.broadcast %cst : f32 to vector<16x64xf32>
    %28 = arith.maximumf %26, %27 : vector<16x64xf32>
    %c0_8 = arith.constant 0 : index
    %c0_9 = arith.constant 0 : index
    %29 = vector.load %arg4[%c0_8, %c0_9] : memref<64x128xf32, #tpu.memory_space<vmem>>, vector<64x128xf32>
    %cst_10 = arith.constant dense<0.000000e+00> : vector<16x128xf32>
    %30 = tpu.matmul %28, %29, %cst_10 {dimension_numbers = #tpu.dot_dimension_numbers<[1], [0], [0], [1], [0, 0, 1, 1], [], []>} : vector<16x64xf32>, vector<64x128xf32>, vector<16x128xf32> -> vector<16x128xf32>
    %c0_11 = arith.constant 0 : index
    %c0_12 = arith.constant 0 : index
    %31 = vector.load %arg5[%c0_11, %c0_12] : memref<1x128xf32, #tpu.memory_space<vmem>>, vector<1x128xf32>
    %32 = vector.broadcast %31 : vector<1x128xf32> to vector<16x128xf32>
    %33 = arith.addf %30, %32 : vector<16x128xf32>
    %cst_13 = arith.constant 0.000000e+00 : f32
    %34 = vector.broadcast %cst_13 : f32 to vector<16x128xf32>
    %35 = arith.maximumf %33, %34 : vector<16x128xf32>
    %c0_14 = arith.constant 0 : index
    %c0_15 = arith.constant 0 : index
    %36 = vector.load %arg6[%c0_14, %c0_15] : memref<128x256xf32, #tpu.memory_space<vmem>>, vector<128x256xf32>
    %cst_16 = arith.constant dense<0.000000e+00> : vector<16x256xf32>
    %37 = tpu.matmul %35, %36, %cst_16 {dimension_numbers = #tpu.dot_dimension_numbers<[1], [0], [0], [1], [0, 0, 1, 1], [], []>} : vector<16x128xf32>, vector<128x256xf32>, vector<16x256xf32> -> vector<16x256xf32>
    %c0_17 = arith.constant 0 : index
    %c0_18 = arith.constant 0 : index
    %38 = vector.load %arg7[%c0_17, %c0_18] : memref<1x256xf32, #tpu.memory_space<vmem>>, vector<1x256xf32>
    %39 = vector.broadcast %38 : vector<1x256xf32> to vector<16x256xf32>
    %40 = arith.addf %37, %39 : vector<16x256xf32>
    %c0_19 = arith.constant 0 : index
    %c0_20 = arith.constant 0 : index
    %41 = vector.load %arg8[%c0_19, %c0_20] : memref<16x256xf32, #tpu.memory_space<vmem>>, vector<16x256xf32>
    tpu.vector_store %arg8[%c0_19, %c0_20], %40 {strides = array<i32>} : memref<16x256xf32, #tpu.memory_space<vmem>>, vector<16x256xf32>,
    return
  }
  func.func @transform_0(%arg0: i32) -> (i32, i32) {
    %c0_i32 = arith.constant 0 : i32
    %c0_i32_0 = arith.constant 0 : i32
    return %arg0, %c0_i32 : i32, i32
  }
  func.func @transform_1(%arg0: i32) -> (i32, i32) {
    %c0_i32 = arith.constant 0 : i32
    %c0_i32_0 = arith.constant 0 : i32
    %c0_i32_1 = arith.constant 0 : i32
    return %c0_i32, %c0_i32_0 : i32, i32
  }
  func.func @transform_2(%arg0: i32) -> (i32, i32) {
    %c0_i32 = arith.constant 0 : i32
    %c0_i32_0 = arith.constant 0 : i32
    %c0_i32_1 = arith.constant 0 : i32
    return %c0_i32, %c0_i32_0 : i32, i32
  }
  func.func @transform_3(%arg0: i32) -> (i32, i32) {
    %c0_i32 = arith.constant 0 : i32
    %c0_i32_0 = arith.constant 0 : i32
    %c0_i32_1 = arith.constant 0 : i32
    return %c0_i32, %c0_i32_0 : i32, i32
  }
  func.func @transform_4(%arg0: i32) -> (i32, i32) {
    %c0_i32 = arith.constant 0 : i32
    %c0_i32_0 = arith.constant 0 : i32
    %c0_i32_1 = arith.constant 0 : i32
    return %c0_i32, %c0_i32_0 : i32, i32
  }
  func.func @transform_5(%arg0: i32) -> (i32, i32) {
    %c0_i32 = arith.constant 0 : i32
    %c0_i32_0 = arith.constant 0 : i32
    %c0_i32_1 = arith.constant 0 : i32
    return %c0_i32, %c0_i32_0 : i32, i32
  }
  func.func @transform_6(%arg0: i32) -> (i32, i32) {
    %c0_i32 = arith.constant 0 : i32
    %c0_i32_0 = arith.constant 0 : i32
    %c0_i32_1 = arith.constant 0 : i32
    return %c0_i32, %c0_i32_0 : i32, i32
  }
  func.func @transform_7(%arg0: i32) -> (i32, i32) {
    %c0_i32 = arith.constant 0 : i32
    %c0_i32_0 = arith.constant 0 : i32
    return %arg0, %c0_i32 : i32, i32
  }
}

</mosaic_0001>

<llo_original>
// kernel: tpu_custom_call.1
$region0: #{tpu_custom_call.1}
  #allocation0 [shape = 'u32[]', space=smem, size = 0x4, offset = 0x4, fixed_abs, tag = 'smem constant byte address 0x4 - core index']
  #allocation1 [shape = 'u32[144,128]{1,0:T(1,128)}', space=vmem, size = 0x12000, scoped, tag = 'internal scratch']
  %s0 = inlined_call_operand.vmem [shape: f32[32,4], index: 0, kind: input, shape index: {}]
  %s1 = inlined_call_operand.vmem [shape: f32[4,64], index: 1, kind: input, shape index: {}]
  %s2 = inlined_call_operand.vmem [shape: f32[1,64], index: 2, kind: input, shape index: {}]
  %s3 = inlined_call_operand.hbm [shape: f32[64,128], index: 3, kind: input, shape index: {}]
  %s4 = inlined_call_operand.vmem [shape: f32[1,128], index: 4, kind: input, shape index: {}]
  %s5 = inlined_call_operand.hbm [shape: f32[128,256], index: 5, kind: input, shape index: {}]
  %s6 = inlined_call_operand.vmem [shape: f32[1,256], index: 6, kind: input, shape index: {}]
  %s7 = inlined_call_operand.hbm [shape: f32[32,256], index: 7, kind: output, shape index: {}]
  %s8 = sld [smem:[#allocation0]]
  $region69: #{tpu_custom_call.1} parent=0
    _
  %s10 = ssub.s32 1, %s8
  %s11 = scalar_select 0, %s10, %s8
  $region1: #{tpu_custom_call.1} parent=0
    #allocation2 [shape = 'u8[32768]{0}', space=vmem, size = 0x8000, scoped, tag = 'input window, operand 3, single buffered']
    #allocation3 [shape = 's32[2]{0}', space=sflag, size = 0x8, scoped, tag = 'scoped memory for tpu_custom_call.1']
    #allocation4 [shape = 's32[2]{0}', space=sflag, size = 0x8, scoped, tag = 'scoped memory for tpu_custom_call.1']
    #allocation5 [shape = 'u8[131072]{0}', space=vmem, size = 0x20000, scoped, tag = 'input window, operand 5, single buffered']
    #allocation6 [shape = 's32[1]{0}', space=sflag, size = 0x4, scoped, tag = 'scoped memory for tpu_custom_call.1']
    #allocation7 [shape = 'u8[32768]{0}', space=vmem, size = 0x8000, scoped, tag = 'output window, operand 0']
    %12 = vsyncpa [#allocation3], 0
    %13 = vsyncpa [#allocation6], 0
    %14 = vsyncpa [#allocation4], 0
    %s15 = scalar_lea.sflag [#allocation4], 1
    %16 = vsyncpa %s15, 0
    loop: start=0, step=1, limit=4
    $region2: #{tpu_custom_call.1} parent=1 // loop_pre_header
      _
    $region3: #{tpu_custom_call.1} parent=1 // loop_header
      %s18 = sphi 0, %s22
      %p19 = scmp.ge.s32.totalorder %s18, 4
      %s28 = sphi 0, %s30
      %s31 = sphi 0, %s28
      %s32 = sphi 0, %s31
      %s48 = sphi 0, %s32
      %s52 = sphi 0, %s52
      %s54 = sphi 0, %s52
      %s55 = sphi 0, %s54
      %s69 = sphi 0, %s55
      %s73 = sphi 0, %s73
      %s75 = sphi 0, %s73
      %s76 = sphi 0, %s75
      %s90 = sphi 0, %s76
      %s94 = sphi 0, %s94
      %s96 = sphi 0, %s94
      %s97 = sphi 0, %s96
      %s111 = sphi 0, %s97
      %s115 = sphi 0, %s115
      %s117 = sphi 0, %s115
      %s118 = sphi 0, %s117
      %s132 = sphi 0, %s118
      %s136 = sphi 0, %s136
      %s138 = sphi 0, %s136
      %s139 = sphi 0, %s138
      %s153 = sphi 0, %s139
      %s157 = sphi 0, %s157
      %s159 = sphi 0, %s157
      %s160 = sphi 0, %s159
      %s174 = sphi 0, %s160
      %s180 = sphi 0, %s182
      %s183 = sphi 0, %s180
      %s184 = sphi 0, %s183
      %s200 = sphi 0, %s184
    $region4: #{tpu_custom_call.1} parent=1 // loop_header_branch
      %21 = sbr.rel (%p19) target = $region8
    $region5: #{tpu_custom_call.1} parent=1 // loop_body
      %s23 = ssub.s32 %s18, 1
      %s24 = ssub.s32 %s18, 2
      %s25 = sadd.s32 %s18, 1
      %s26 = ssub.s32 %s18, %s25
      %p27 = scmp.eq.s32.totalorder %s26, 0
      %s29 = sadd.s32 %s28, 1
      %s30 = scalar_select %p27, %s28, %s29
      %p33 = pneg %p27
      %p34 = scmp.eq.s32.totalorder %s18, 1
      %p35 = por %p33, %p34
      %p36 = scmp.ne.s32.totalorder %s28, %s31
      %p37 = scmp.eq.s32.totalorder %s18, 0
      %p38 = por %p36, %p37
      %p39 = scmp.ne.s32.totalorder %s28, %s31
      %p40 = scmp.eq.s32.totalorder %s23, 1
      %p41 = por %p39, %p40
      %p42 = scmp.ne.s32.totalorder %s31, %s32
      %p43 = scmp.eq.s32.totalorder %s23, 0
      %p44 = por %p42, %p43
      %p45 = scmp.ne.s32.totalorder %s31, %s32
      %p46 = scmp.eq.s32.totalorder %s24, 1
      %p47 = por %p45, %p46
      %p49 = scmp.ne.s32.totalorder %s32, %s48
      %p50 = scmp.eq.s32.totalorder %s24, 0
      %p51 = por %p49, %p50
      %s53 = sadd.s32 %s52, 1
      %p56 = scmp.eq.s32.totalorder %s18, 1
      %p57 = scmp.ne.s32.totalorder %s52, %s54
      %p58 = scmp.eq.s32.totalorder %s18, 0
      %p59 = por %p57, %p58
      %p60 = scmp.ne.s32.totalorder %s52, %s54
      %p61 = scmp.eq.s32.totalorder %s23, 1
      %p62 = por %p60, %p61
      %p63 = scmp.ne.s32.totalorder %s54, %s55
      %p64 = scmp.eq.s32.totalorder %s23, 0
      %p65 = por %p63, %p64
      %p66 = scmp.ne.s32.totalorder %s54, %s55
      %p67 = scmp.eq.s32.totalorder %s24, 1
      %p68 = por %p66, %p67
      %p70 = scmp.ne.s32.totalorder %s55, %s69
      %p71 = scmp.eq.s32.totalorder %s24, 0
      %p72 = por %p70, %p71
      %s74 = sadd.s32 %s73, 1
      %p77 = scmp.eq.s32.totalorder %s18, 1
      %p78 = scmp.ne.s32.totalorder %s73, %s75
      %p79 = scmp.eq.s32.totalorder %s18, 0
      %p80 = por %p78, %p79
      %p81 = scmp.ne.s32.totalorder %s73, %s75
      %p82 = scmp.eq.s32.totalorder %s23, 1
      %p83 = por %p81, %p82
      %p84 = scmp.ne.s32.totalorder %s75, %s76
      %p85 = scmp.eq.s32.totalorder %s23, 0
      %p86 = por %p84, %p85
      %p87 = scmp.ne.s32.totalorder %s75, %s76
      %p88 = scmp.eq.s32.totalorder %s24, 1
      %p89 = por %p87, %p88
      %p91 = scmp.ne.s32.totalorder %s76, %s90
      %p92 = scmp.eq.s32.totalorder %s24, 0
      %p93 = por %p91, %p92
      %s95 = sadd.s32 %s94, 1
      %p98 = scmp.eq.s32.totalorder %s18, 1
      %p99 = scmp.ne.s32.totalorder %s94, %s96
      %p100 = scmp.eq.s32.totalorder %s18, 0
      %p101 = por %p99, %p100
      %p102 = scmp.ne.s32.totalorder %s94, %s96
      %p103 = scmp.eq.s32.totalorder %s23, 1
      %p104 = por %p102, %p103
      %p105 = scmp.ne.s32.totalorder %s96, %s97
      %p106 = scmp.eq.s32.totalorder %s23, 0
      %p107 = por %p105, %p106
      %p108 = scmp.ne.s32.totalorder %s96, %s97
      %p109 = scmp.eq.s32.totalorder %s24, 1
      %p110 = por %p108, %p109
      %p112 = scmp.ne.s32.totalorder %s97, %s111
      %p113 = scmp.eq.s32.totalorder %s24, 0
      %p114 = por %p112, %p113
      %s116 = sadd.s32 %s115, 1
      %p119 = scmp.eq.s32.totalorder %s18, 1
      %p120 = scmp.ne.s32.totalorder %s115, %s117
      %p121 = scmp.eq.s32.totalorder %s18, 0
      %p122 = por %p120, %p121
      %p123 = scmp.ne.s32.totalorder %s115, %s117
      %p124 = scmp.eq.s32.totalorder %s23, 1
      %p125 = por %p123, %p124
      %p126 = scmp.ne.s32.totalorder %s117, %s118
      %p127 = scmp.eq.s32.totalorder %s23, 0
      %p128 = por %p126, %p127
      %p129 = scmp.ne.s32.totalorder %s117, %s118
      %p130 = scmp.eq.s32.totalorder %s24, 1
      %p131 = por %p129, %p130
      %p133 = scmp.ne.s32.totalorder %s118, %s132
      %p134 = scmp.eq.s32.totalorder %s24, 0
      %p135 = por %p133, %p134
      %s137 = sadd.s32 %s136, 1
      %p140 = scmp.eq.s32.totalorder %s18, 1
      %p141 = scmp.ne.s32.totalorder %s136, %s138
      %p142 = scmp.eq.s32.totalorder %s18, 0
      %p143 = por %p141, %p142
      %p144 = scmp.ne.s32.totalorder %s136, %s138
      %p145 = scmp.eq.s32.totalorder %s23, 1
      %p146 = por %p144, %p145
      %p147 = scmp.ne.s32.totalorder %s138, %s139
      %p148 = scmp.eq.s32.totalorder %s23, 0
      %p149 = por %p147, %p148
      %p150 = scmp.ne.s32.totalorder %s138, %s139
      %p151 = scmp.eq.s32.totalorder %s24, 1
      %p152 = por %p150, %p151
      %p154 = scmp.ne.s32.totalorder %s139, %s153
      %p155 = scmp.eq.s32.totalorder %s24, 0
      %p156 = por %p154, %p155
      %s158 = sadd.s32 %s157, 1
      %p161 = scmp.eq.s32.totalorder %s18, 1
      %p162 = scmp.ne.s32.totalorder %s157, %s159
      %p163 = scmp.eq.s32.totalorder %s18, 0
      %p164 = por %p162, %p163
      %p165 = scmp.ne.s32.totalorder %s157, %s159
      %p166 = scmp.eq.s32.totalorder %s23, 1
      %p167 = por %p165, %p166
      %p168 = scmp.ne.s32.totalorder %s159, %s160
      %p169 = scmp.eq.s32.totalorder %s23, 0
      %p170 = por %p168, %p169
      %p171 = scmp.ne.s32.totalorder %s159, %s160
      %p172 = scmp.eq.s32.totalorder %s24, 1
      %p173 = por %p171, %p172
      %p175 = scmp.ne.s32.totalorder %s160, %s174
      %p176 = scmp.eq.s32.totalorder %s24, 0
      %p177 = por %p175, %p176
      %s178 = ssub.s32 %s18, %s25
      %p179 = scmp.eq.s32.totalorder %s178, 0
      %s181 = sadd.s32 %s180, 1
      %s182 = scalar_select %p179, %s180, %s181
      %p185 = pneg %p179
      %p186 = scmp.eq.s32.totalorder %s18, 1
      %p187 = por %p185, %p186
      %p188 = scmp.ne.s32.totalorder %s180, %s183
      %p189 = scmp.eq.s32.totalorder %s18, 0
      %p190 = por %p188, %p189
      %p191 = scmp.ne.s32.totalorder %s180, %s183
      %p192 = scmp.eq.s32.totalorder %s23, 1
      %p193 = por %p191, %p192
      %p194 = scmp.ne.s32.totalorder %s183, %s184
      %p195 = scmp.eq.s32.totalorder %s23, 0
      %p196 = por %p194, %p195
      %p197 = scmp.ne.s32.totalorder %s183, %s184
      %p198 = scmp.eq.s32.totalorder %s24, 1
      %p199 = por %p197, %p198
      %p201 = scmp.ne.s32.totalorder %s184, %s200
      %p202 = scmp.eq.s32.totalorder %s24, 0
      %p203 = por %p201, %p202
      %p204 = scmp.le.s32.totalorder 1, %s18
      %p205 = scmp.lt.s32.totalorder %s18, 3
      %p206 = pnand %p204, %p205
      %p207 = pneg %p206
      // Predicated region
      $region9: #{tpu_custom_call.1} parent=5 // pred_check
        _
      $region10: #{tpu_custom_call.1} parent=5 // pred_check_branch
        %209 = sbr.rel (%p206) target = $region12
      $region11: #{tpu_custom_call.1} parent=5 // pred_region
        %s210 = ssub.s32 %s18, 1
        // Predicated region
        $region13: #{tpu_custom_call.1} parent=11 // pred_check
          %p211 = pneg %p65
        $region14: #{tpu_custom_call.1} parent=11 // pred_check_branch
          %213 = sbr.rel (%p211) target = $region16
        $region15: #{tpu_custom_call.1} parent=11 // pred_region
          _
        $region16: #{tpu_custom_call.1} parent=11 // pred_fallthru
          _
        // Predicated region
        $region17: #{tpu_custom_call.1} parent=11 // pred_check
          %p214 = pneg %p86
        $region18: #{tpu_custom_call.1} parent=11 // pred_check_branch
          %216 = sbr.rel (%p214) target = $region20
        $region19: #{tpu_custom_call.1} parent=11 // pred_region
          _
        $region20: #{tpu_custom_call.1} parent=11 // pred_fallthru
          _
        // Predicated region
        $region21: #{tpu_custom_call.1} parent=11 // pred_check
          %p217 = pneg %p107
        $region22: #{tpu_custom_call.1} parent=11 // pred_check_branch
          %219 = sbr.rel (%p217) target = $region24
        $region23: #{tpu_custom_call.1} parent=11 // pred_region
          %s221 = ssub.s32 1024, 1024
          %222 = vsyncadd [#allocation3], %s221
          %s223 = sshll.u32 [#allocation2], 4
          %s224 = int_to_ptr.vmem [resolvable:$true] %s223
          %229 = dma.hbm_to_vmem [thread:$0]  %s3, 1024, %s224, [#allocation3], 128, 128, 8
        $region24: #{tpu_custom_call.1} parent=11 // pred_fallthru
          _
        // Predicated region
        $region25: #{tpu_custom_call.1} parent=11 // pred_check
          %p230 = pneg %p128
        $region26: #{tpu_custom_call.1} parent=11 // pred_check_branch
          %232 = sbr.rel (%p230) target = $region28
        $region27: #{tpu_custom_call.1} parent=11 // pred_region
          _
        $region28: #{tpu_custom_call.1} parent=11 // pred_fallthru
          _
        // Predicated region
        $region29: #{tpu_custom_call.1} parent=11 // pred_check
          %p233 = pneg %p149
        $region30: #{tpu_custom_call.1} parent=11 // pred_check_branch
          %235 = sbr.rel (%p233) target = $region32
        $region31: #{tpu_custom_call.1} parent=11 // pred_region
          %s237 = ssub.s32 4096, 4096
          %238 = vsyncadd [#allocation6], %s237
          %s239 = sshll.u32 [#allocation5], 4
          %s240 = int_to_ptr.vmem [resolvable:$true] %s239
          %245 = dma.hbm_to_vmem [thread:$0]  %s5, 4096, %s240, [#allocation6], 256, 256, 16
        $region32: #{tpu_custom_call.1} parent=11 // pred_fallthru
          _
        // Predicated region
        $region33: #{tpu_custom_call.1} parent=11 // pred_check
          %p246 = pneg %p170
        $region34: #{tpu_custom_call.1} parent=11 // pred_check_branch
          %248 = sbr.rel (%p246) target = $region36
        $region35: #{tpu_custom_call.1} parent=11 // pred_region
          _
        $region36: #{tpu_custom_call.1} parent=11 // pred_fallthru
          _
      $region12: #{tpu_custom_call.1} parent=5 // pred_fallthru
        _
      %p249 = scmp.lt.s32.totalorder %s18, 2
      // Predicated region
      $region37: #{tpu_custom_call.1} parent=5 // pred_check
        %p250 = pneg %p249
      $region38: #{tpu_custom_call.1} parent=5 // pred_check_branch
        %252 = sbr.rel (%p250) target = $region40
      $region39: #{tpu_custom_call.1} parent=5 // pred_region
        // Predicated region
        $region41: #{tpu_custom_call.1} parent=39 // pred_check
          %p253 = pneg %p38
        $region42: #{tpu_custom_call.1} parent=39 // pred_check_branch
          %255 = sbr.rel (%p253) target = $region44
        $region43: #{tpu_custom_call.1} parent=39 // pred_region
          %s256 = smul.u32 2, %s18
          %p257 = scmp.lt.s32.totalorder %s256, 3
          %s258 = scalar_select %p257, %s256, 3
          %s259 = smul.addr %s258, 8
          %s260 = scalar_lea.vmem %s0, %s259
          %s261 = smul.u32 2, %s18
        $region44: #{tpu_custom_call.1} parent=39 // pred_fallthru
          _
      $region40: #{tpu_custom_call.1} parent=5 // pred_fallthru
        _
      %p262 = scmp.le.s32.totalorder 1, %s18
      %p263 = scmp.lt.s32.totalorder %s18, 3
      %p264 = pnand %p262, %p263
      %p265 = pneg %p264
      // Predicated region
      $region45: #{tpu_custom_call.1} parent=5 // pred_check
        _
      $region46: #{tpu_custom_call.1} parent=5 // pred_check_branch
        %267 = sbr.rel (%p264) target = $region48
      $region47: #{tpu_custom_call.1} parent=5 // pred_region
        %s268 = ssub.s32 %s18, 1
        // Predicated region
        $region49: #{tpu_custom_call.1} parent=47 // pred_check
          %p269 = pneg %p107
        $region50: #{tpu_custom_call.1} parent=47 // pred_check_branch
          %271 = sbr.rel (%p269) target = $region52
        $region51: #{tpu_custom_call.1} parent=47 // pred_region
          %272 = dma.done [#allocation3], 1024
        $region52: #{tpu_custom_call.1} parent=47 // pred_fallthru
          _
        // Predicated region
        $region53: #{tpu_custom_call.1} parent=47 // pred_check
          %p273 = pneg %p149
        $region54: #{tpu_custom_call.1} parent=47 // pred_check_branch
          %275 = sbr.rel (%p273) target = $region56
        $region55: #{tpu_custom_call.1} parent=47 // pred_region
          %276 = dma.done [#allocation6], 4096
        $region56: #{tpu_custom_call.1} parent=47 // pred_fallthru
          _
        %s277 = smul.u32 2, %s23
        %p278 = scmp.lt.s32.totalorder %s277, 3
        %s279 = scalar_select %p278, %s277, 3
        %s280 = smul.addr %s279, 8
        %s281 = scalar_lea.vmem %s0, %s280
        %p282 = pneg %p44
        %p283 = pneg %p41
        %p284 = pneg %p65
        %p285 = pneg %p62
        %p286 = pneg %p86
        %p287 = pneg %p83
        %p288 = pneg %p107
        %p289 = pneg %p104
        %p290 = pneg %p128
        %p291 = pneg %p125
        %p292 = pneg %p149
        %p293 = pneg %p146
        %p294 = pneg %p170
        %p295 = pneg %p167
        %p296 = pneg %p196
        %p297 = pneg %p193
        %s298 = sand.u32 %s183, 1
        %s299 = scalar_lea.sflag [#allocation4], %s298
        %s300 = sand.u32 %s183, 1
        %s301 = smul.addr %s300, 32
        %s302 = scalar_lea.vmem [#allocation7], %s301
        %s303 = smul.u32 2, %s23
        %p304 = scmp.lt.s32.totalorder %s303, 3
        %s305 = scalar_select %p304, %s303, 3
        %s306 = smul.addr %s305, 8
        %s307 = scalar_lea.vmem %s0, %s306
        %s308 = smul.u32 2, %s23
        %s309 = smul.u32 2, %s23
        %v310 = vld [vmem:[%s307] sm:$0xff]
        %v311 = vld [vmem:[%s307 + $0x8] sm:$0xff]
        %v312 = vld [vmem:[%s2] sm:$0x1]
        %v313 = vld [vmem:[%s1] sm:$0x1]
        %315 = vset.pattern.permute.xlu0 0
        %316 = vperm.xlu0 %315, %v310
        %v317 = vpop.permute.xlu0 %316
        %320 = vset.pattern.permute.xlu0 0
        %321 = vperm.xlu0 %320, %v311
        %v322 = vpop.permute.xlu0 %321
        %v324 = vlaneseq
        %v325 = vshrl.u32 %v324, 7
        %v326 = vsub.s32 0, %v325
        %v327 = vrot.slane %v313, %v326
        %v328 = vmul.f32 %v317, %v327
        %v329 = vmul.f32 %v322, %v327
        %v331 = vlaneseq
        %v332 = vshrl.u32 %v331, 7
        %v333 = vsub.s32 0, %v332
        %v334 = vrot.slane %v312, %v333
        %v336 = vadd.f32 %v334, %v328
        %v337 = vadd.f32 %v334, %v329
        %v338 = vld [vmem:[%s1 + $0x1] sm:$0x1]
        %339 = vset.pattern.permute.xlu0 1
        %340 = vperm.xlu0 %339, %v310
        %v341 = vpop.permute.xlu0 %340
        %343 = vset.pattern.permute.xlu0 1
        %344 = vperm.xlu0 %343, %v311
        %v345 = vpop.permute.xlu0 %344
        %v347 = vlaneseq
        %v348 = vshrl.u32 %v347, 7
        %v349 = vsub.s32 0, %v348
        %v350 = vrot.slane %v338, %v349
        %v351 = vmul.f32 %v341, %v350
        %v352 = vmul.f32 %v345, %v350
        %v353 = vadd.f32 %v336, %v351
        %v354 = vadd.f32 %v337, %v352
        %v355 = vld [vmem:[%s1 + $0x2] sm:$0x1]
        %356 = vset.pattern.permute.xlu0 2
        %357 = vperm.xlu0 %356, %v310
        %v358 = vpop.permute.xlu0 %357
        %360 = vset.pattern.permute.xlu0 2
        %361 = vperm.xlu0 %360, %v311
        %v362 = vpop.permute.xlu0 %361
        %v364 = vlaneseq
        %v365 = vshrl.u32 %v364, 7
        %v366 = vsub.s32 0, %v365
        %v367 = vrot.slane %v355, %v366
        %v368 = vmul.f32 %v358, %v367
        %v369 = vmul.f32 %v362, %v367
        %v370 = vadd.f32 %v353, %v368
        %v371 = vadd.f32 %v354, %v369
        %v372 = vld [vmem:[%s1 + $0x3] sm:$0x1]
        %373 = vset.pattern.permute.xlu0 3
        %374 = vperm.xlu0 %373, %v310
        %v375 = vpop.permute.xlu0 %374
        %377 = vset.pattern.permute.xlu0 3
        %378 = vperm.xlu0 %377, %v311
        %v379 = vpop.permute.xlu0 %378
        %v381 = vlaneseq
        %v382 = vshrl.u32 %v381, 7
        %v383 = vsub.s32 0, %v382
        %v384 = vrot.slane %v372, %v383
        %v385 = vmul.f32 %v375, %v384
        %v386 = vmul.f32 %v379, %v384
        %v387 = vadd.f32 %v370, %v385
        %v388 = vadd.f32 %v371, %v386
        %v389 = vmax.f32 %v387, 0.0
        %v390 = vmax.f32 %v388, 0.0
        %v391 = vld [vmem:[#allocation2] sm:$0xff]
        %v392 = vld [vmem:[#allocation2 + $0x8] sm:$0xff]
        %v393 = vld [vmem:[#allocation2 + $0x10] sm:$0xff]
        %v394 = vld [vmem:[#allocation2 + $0x18] sm:$0xff]
        %v395 = vld [vmem:[#allocation2 + $0x20] sm:$0xff]
        %v396 = vld [vmem:[#allocation2 + $0x28] sm:$0xff]
        %v397 = vld [vmem:[#allocation2 + $0x30] sm:$0xff]
        %v398 = vld [vmem:[#allocation2 + $0x38] sm:$0xff]
        %v399 = vld [vmem:[%s4] sm:$0x1]
        %v401 = vlaneseq
        %v402 = vshrl.u32 %v401, 7
        %v403 = vsub.s32 0, %v402
        %v404 = vrot.slane %v399, %v403
        %vm406 = vcmask 523264
        %v408 = vsel %vm406, %v389, 0
        %v411 = vsel %vm406, %v390, 0
        %413 = vmatprep.subr.mxu0 0.0
        %414 = vmatpush1.msra.mxu0 %v391
        %415 = vmatprep.subr.mxu0 0.0
        %416 = vmatpush1.msra.mxu0 %v392
        %417 = vmatprep.subr.mxu0 0.0
        %418 = vmatpush1.msra.mxu0 %v393
        %419 = vmatprep.subr.mxu0 0.0
        %420 = vmatpush1.msra.mxu0 %v394
        %421 = vmatprep.subr.mxu0 0.0
        %422 = vmatpush1.msra.mxu0 %v395
        %423 = vmatprep.subr.mxu0 0.0
        %424 = vmatpush1.msra.mxu0 %v396
        %425 = vmatprep.subr.mxu0 0.0
        %426 = vmatpush1.msra.mxu0 %v397
        %427 = vmatprep.subr.mxu0 0.0
        %428 = vmatpush1.msra.mxu0 %v398
        %429 = vmatprep.subr.mxu0 0.0
        %430 = vmatpush1.msra.mxu0 0.0
        %431 = vmatprep.subr.mxu0 0.0
        %432 = vmatpush1.msra.mxu0 0.0
        %433 = vmatprep.subr.mxu0 0.0
        %434 = vmatpush1.msra.mxu0 0.0
        %435 = vmatprep.subr.mxu0 0.0
        %436 = vmatpush1.msra.mxu0 0.0
        %437 = vmatprep.subr.mxu0 0.0
        %438 = vmatpush1.msra.mxu0 0.0
        %439 = vmatprep.subr.mxu0 0.0
        %440 = vmatpush1.msra.mxu0 0.0
        %441 = vmatprep.subr.mxu0 0.0
        %442 = vmatpush1.msra.mxu0 0.0
        %443 = vmatprep.subr.mxu0 0.0
        %444 = vmatpush1.msra.mxu0 0.0
        %445 = vmatprep.subr.mxu0 0.0
        %446 = vmatpush1.msra.mxu0 0.0
        %447 = vmatprep.subr.mxu0 0.0
        %448 = vmatpush1.msra.mxu0 0.0
        %449 = vmatprep.subr.mxu0 0.0
        %450 = vmatpush1.msra.mxu0 0.0
        %451 = vmatprep.subr.mxu0 0.0
        %452 = vmatpush1.msra.mxu0 0.0
        %453 = vmatprep.subr.mxu0 0.0
        %454 = vmatpush1.msra.mxu0 0.0
        %455 = vmatprep.subr.mxu0 0.0
        %456 = vmatpush1.msra.mxu0 0.0
        %457 = vmatprep.subr.mxu0 0.0
        %458 = vmatpush1.msra.mxu0 0.0
        %459 = vmatprep.subr.mxu0 0.0
        %460 = vmatpush1.msra.mxu0 0.0
        %461 = vmatprep.subr.mxu0 0.0
        %462 = vmatpush1.msra.mxu0 0.0
        %463 = vmatprep.subr.mxu0 0.0
        %464 = vmatpush1.msra.mxu0 0.0
        %465 = vmatprep.subr.mxu0 0.0
        %466 = vmatpush1.msra.mxu0 0.0
        %467 = vmatprep.subr.mxu0 0.0
        %468 = vmatpush1.msra.mxu0 0.0
        %469 = vmatprep.subr.mxu0 0.0
        %470 = vmatpush1.msra.mxu0 0.0
        %471 = vmatprep.subr.mxu0 0.0
        %472 = vmatpush1.msra.mxu0 0.0
        %473 = vmatprep.subr.mxu0 0.0
        %474 = vmatpush1.msra.mxu0 0.0
        %475 = vmatprep.subr.mxu0 0.0
        %476 = vmatpush1.msra.mxu0 0.0
        %477 = vmatprep.mubr.f32.mxu0 0.0
        %478 = vmatmul.mubr.f32.gmra.mrb[0].mxu0 %v408
        %v479 = vpop.f32.mrb[0].mxu0
        %v480 = vadd.f32 %v404, %v479
        %v481 = vpop.f32.mrb[0].mxu0
        %482 = vmatprep.mubr.f32.mxu0 0.0
        %483 = vmatmul.mubr.f32.gmra.mrb[0].mxu0 %v411
        %v484 = vpop.f32.mrb[0].mxu0
        %v485 = vadd.f32 %v404, %v484
        %v486 = vpop.f32.mrb[0].mxu0
        %487 = vdwg.mxu0
        %v488 = vmax.f32 %v480, 0.0
        %v489 = vmax.f32 %v485, 0.0
        %v490 = vld [vmem:[#allocation5] sm:$0xff]
        %v491 = vld [vmem:[#allocation5 + $0x8] sm:$0xff]
        %v492 = vld [vmem:[#allocation5 + $0x10] sm:$0xff]
        %v493 = vld [vmem:[#allocation5 + $0x18] sm:$0xff]
        %v494 = vld [vmem:[#allocation5 + $0x20] sm:$0xff]
        %v495 = vld [vmem:[#allocation5 + $0x28] sm:$0xff]
        %v496 = vld [vmem:[#allocation5 + $0x30] sm:$0xff]
        %v497 = vld [vmem:[#allocation5 + $0x38] sm:$0xff]
        %v498 = vld [vmem:[#allocation5 + $0x40] sm:$0xff]
        %v499 = vld [vmem:[#allocation5 + $0x48] sm:$0xff]
        %v500 = vld [vmem:[#allocation5 + $0x50] sm:$0xff]
        %v501 = vld [vmem:[#allocation5 + $0x58] sm:$0xff]
        %v502 = vld [vmem:[#allocation5 + $0x60] sm:$0xff]
        %v503 = vld [vmem:[#allocation5 + $0x68] sm:$0xff]
        %v504 = vld [vmem:[#allocation5 + $0x70] sm:$0xff]
        %v505 = vld [vmem:[#allocation5 + $0x78] sm:$0xff]
        %v506 = vld [vmem:[#allocation5 + $0x80] sm:$0xff]
        %v507 = vld [vmem:[#allocation5 + $0x88] sm:$0xff]
        %v508 = vld [vmem:[#allocation5 + $0x90] sm:$0xff]
        %v509 = vld [vmem:[#allocation5 + $0x98] sm:$0xff]
        %v510 = vld [vmem:[#allocation5 + $0xa0] sm:$0xff]
        %v511 = vld [vmem:[#allocation5 + $0xa8] sm:$0xff]
        %v512 = vld [vmem:[#allocation5 + $0xb0] sm:$0xff]
        %v513 = vld [vmem:[#allocation5 + $0xb8] sm:$0xff]
        %v514 = vld [vmem:[#allocation5 + $0xc0] sm:$0xff]
        %v515 = vld [vmem:[#allocation5 + $0xc8] sm:$0xff]
        %v516 = vld [vmem:[#allocation5 + $0xd0] sm:$0xff]
        %v517 = vld [vmem:[#allocation5 + $0xd8] sm:$0xff]
        %v518 = vld [vmem:[#allocation5 + $0xe0] sm:$0xff]
        %v519 = vld [vmem:[#allocation5 + $0xe8] sm:$0xff]
        %v520 = vld [vmem:[#allocation5 + $0xf0] sm:$0xff]
        %v521 = vld [vmem:[#allocation5 + $0xf8] sm:$0xff]
        %v522 = vld [vmem:[%s6] sm:$0x3]
        %v524 = vlaneseq
        %v525 = vshrl.u32 %v524, 7
        %v526 = vsub.s32 0, %v525
        %v527 = vrot.slane %v522, %v526
        %v528 = vlaneseq
        %v529 = vshrl.u32 %v528, 7
        %v530 = vsub.s32 1, %v529
        %v531 = vrot.slane %v522, %v530
        %534 = vmatprep.subr.mxu0 %v491
        %535 = vmatpush1.msra.mxu0 %v490
        %536 = vmatprep.subr.mxu0 %v493
        %537 = vmatpush1.msra.mxu0 %v492
        %538 = vmatprep.subr.mxu0 %v495
        %539 = vmatpush1.msra.mxu0 %v494
        %540 = vmatprep.subr.mxu0 %v497
        %541 = vmatpush1.msra.mxu0 %v496
        %542 = vmatprep.subr.mxu0 %v499
        %543 = vmatpush1.msra.mxu0 %v498
        %544 = vmatprep.subr.mxu0 %v501
        %545 = vmatpush1.msra.mxu0 %v500
        %546 = vmatprep.subr.mxu0 %v503
        %547 = vmatpush1.msra.mxu0 %v502
        %548 = vmatprep.subr.mxu0 %v505
        %549 = vmatpush1.msra.mxu0 %v504
        %550 = vmatprep.subr.mxu0 %v507
        %551 = vmatpush1.msra.mxu0 %v506
        %552 = vmatprep.subr.mxu0 %v509
        %553 = vmatpush1.msra.mxu0 %v508
        %554 = vmatprep.subr.mxu0 %v511
        %555 = vmatpush1.msra.mxu0 %v510
        %556 = vmatprep.subr.mxu0 %v513
        %557 = vmatpush1.msra.mxu0 %v512
        %558 = vmatprep.subr.mxu0 %v515
        %559 = vmatpush1.msra.mxu0 %v514
        %560 = vmatprep.subr.mxu0 %v517
        %561 = vmatpush1.msra.mxu0 %v516
        %562 = vmatprep.subr.mxu0 %v519
        %563 = vmatpush1.msra.mxu0 %v518
        %564 = vmatprep.subr.mxu0 %v521
        %565 = vmatpush1.msra.mxu0 %v520
        %566 = vmatprep.subr.mxu0 0.0
        %567 = vmatpush1.msra.mxu0 0.0
        %568 = vmatprep.subr.mxu0 0.0
        %569 = vmatpush1.msra.mxu0 0.0
        %570 = vmatprep.subr.mxu0 0.0
        %571 = vmatpush1.msra.mxu0 0.0
        %572 = vmatprep.subr.mxu0 0.0
        %573 = vmatpush1.msra.mxu0 0.0
        %574 = vmatprep.subr.mxu0 0.0
        %575 = vmatpush1.msra.mxu0 0.0
        %576 = vmatprep.subr.mxu0 0.0
        %577 = vmatpush1.msra.mxu0 0.0
        %578 = vmatprep.subr.mxu0 0.0
        %579 = vmatpush1.msra.mxu0 0.0
        %580 = vmatprep.subr.mxu0 0.0
        %581 = vmatpush1.msra.mxu0 0.0
        %582 = vmatprep.subr.mxu0 0.0
        %583 = vmatpush1.msra.mxu0 0.0
        %584 = vmatprep.subr.mxu0 0.0
        %585 = vmatpush1.msra.mxu0 0.0
        %586 = vmatprep.subr.mxu0 0.0
        %587 = vmatpush1.msra.mxu0 0.0
        %588 = vmatprep.subr.mxu0 0.0
        %589 = vmatpush1.msra.mxu0 0.0
        %590 = vmatprep.subr.mxu0 0.0
        %591 = vmatpush1.msra.mxu0 0.0
        %592 = vmatprep.subr.mxu0 0.0
        %593 = vmatpush1.msra.mxu0 0.0
        %594 = vmatprep.subr.mxu0 0.0
        %595 = vmatpush1.msra.mxu0 0.0
        %596 = vmatprep.subr.mxu0 0.0
        %597 = vmatpush1.msra.mxu0 0.0
        %598 = vmatprep.mubr.f32.mxu0 0.0
        %599 = vmatmul.mubr.f32.gmra.mrb[0].mxu0 %v488
        %v600 = vpop.f32.mrb[0].mxu0
        %v601 = vadd.f32 %v527, %v600
        %v602 = vpop.f32.mrb[0].mxu0
        %v603 = vadd.f32 %v531, %v602
        %604 = vmatprep.mubr.f32.mxu0 0.0
        %605 = vmatmul.mubr.f32.gmra.mrb[0].mxu0 %v489
        %v606 = vpop.f32.mrb[0].mxu0
        %v607 = vadd.f32 %v527, %v606
        %v608 = vpop.f32.mrb[0].mxu0
        %v609 = vadd.f32 %v531, %v608
        %610 = vdwg.mxu0
        %611 = vst [vmem:[%s302] sm:$0xff] %v601
        %612 = vst [vmem:[%s302 + $0x8] sm:$0xff] %v603
        %613 = vst [vmem:[%s302 + $0x10] sm:$0xff] %v607
        %614 = vst [vmem:[%s302 + $0x18] sm:$0xff] %v609
        %s615 = sand.u32 %s183, 1
        %s616 = scalar_lea.sflag [#allocation4], %s615
        %s617 = sand.u32 %s183, 1
        %s618 = smul.addr %s617, 32
        %s619 = scalar_lea.vmem [#allocation7], %s618
        // Predicated region
        $region57: #{tpu_custom_call.1} parent=47 // pred_check
          %p620 = pneg %p193
        $region58: #{tpu_custom_call.1} parent=47 // pred_check_branch
          %622 = sbr.rel (%p620) target = $region60
        $region59: #{tpu_custom_call.1} parent=47 // pred_region
          %s623 = smul.u32 2, %s23
          %s625 = ssub.s32 512, 512
          %626 = vsyncadd %s616, %s625
          %s627 = smul.addr %s623, 2
          %s628 = smul.addr %s627, 128
          %s629 = scalar_lea.hbm %s7, %s628
          %s630 = sshll.u32 %s619, 4
          %s631 = int_to_ptr.vmem [resolvable:$true] %s630
          %636 = dma.vmem_to_hbm [thread:$0]  %s631, 512, %s629, %s616, 256, 256, 16
        $region60: #{tpu_custom_call.1} parent=47 // pred_fallthru
          _
      $region48: #{tpu_custom_call.1} parent=5 // pred_fallthru
        _
      %p637 = scmp.le.s32.totalorder 2, %s18
      // Predicated region
      $region61: #{tpu_custom_call.1} parent=5 // pred_check
        %p638 = pneg %p637
      $region62: #{tpu_custom_call.1} parent=5 // pred_check_branch
        %640 = sbr.rel (%p638) target = $region64
      $region63: #{tpu_custom_call.1} parent=5 // pred_region
        %s641 = ssub.s32 %s18, 2
        // Predicated region
        $region65: #{tpu_custom_call.1} parent=63 // pred_check
          %p642 = pneg %p199
        $region66: #{tpu_custom_call.1} parent=63 // pred_check_branch
          %644 = sbr.rel (%p642) target = $region68
        $region67: #{tpu_custom_call.1} parent=63 // pred_region
          %s645 = sand.u32 %s184, 1
          %s646 = scalar_lea.sflag [#allocation4], %s645
          %s647 = sand.u32 %s184, 1
          %s648 = smul.addr %s647, 32
          %s649 = scalar_lea.vmem [#allocation7], %s648
          %650 = dma.done %s646, 512
        $region68: #{tpu_custom_call.1} parent=63 // pred_fallthru
          _
      $region64: #{tpu_custom_call.1} parent=5 // pred_fallthru
        _
    $region6: #{tpu_custom_call.1} parent=1 // loop_footer
      %s22 = sadd.s32 1, %s18
    $region7: #{tpu_custom_call.1} parent=1 // loop_footer_branch
      %17 = sbr.rel target = $region3
    $region8: #{tpu_custom_call.1} parent=1 // loop_exit
      _
    %651 = vsyncpa [#allocation3], 1
    %s652 = scalar_lea.sflag [#allocation3], 1
    %653 = vsyncpa %s652, 1
    %654 = vsyncpa [#allocation6], 1
    %655 = vsyncpa [#allocation4], 1
    %s656 = scalar_lea.sflag [#allocation4], 1
    %657 = vsyncpa %s656, 1

</llo_original>
